<compile_context>
chip_gen: v7x
topology: tpu7x:2x2x1
jax: 0.10.0
libtpu: 0.0.40
codegen_flags: <defaults>
</compile_context>

<pallas_src>
import functools

import jax
import jax.numpy as jnp
from jax import lax
from jax.experimental import pallas as pl
from jax.experimental.pallas import tpu as pltpu


def _round_up(x, m):
    return (x + m - 1) // m * m


def _conv_tile(xm_ref, xh_ref, w_ref, b_ref, *, K, tile):
    """Fused K-tap conv for one lane tile: one (C_out_p, K*C_in_p) x (K*C_in_p, tile) matmul.

    xm_ref : (cin_p, tile)       current lane tile of the padded, flattened input (compute dtype)
    xh_ref : (cin_p, 128)        first 128 lanes of the NEXT tile (halo for taps k>0)
    w_ref  : (cout_p, K*cin_p)   tap-major conv weights (compute dtype)
    b_ref  : (K*cin_p, tile)     compute-dtype im2col scratch (built directly, no staging buffer)
    returns (cout_p, tile) f32 conv output (no bias -- cancelled by train-mode BN).
    """
    cin_p = xm_ref.shape[0]
    for k in range(K):  # static unroll (K = 3): in-kernel im2col shift via lane-offset reads
        if k == 0:
            b_ref[:cin_p, :] = xm_ref[...]
        else:
            b_ref[k * cin_p:(k + 1) * cin_p, :tile - k] = xm_ref[:, k:]
            b_ref[k * cin_p:(k + 1) * cin_p, tile - k:] = xh_ref[:, :k]
    return jnp.dot(w_ref[...], b_ref[...], preferred_element_type=jnp.float32)


def _stats_kernel(xm_ref, xh_ref, w_ref, mask_ref, stats_ref, b_ref, *, K, tile):
    """Pass 1: conv tile + masked per-channel sum / sum-of-squares into this core's slot."""
    y = _conv_tile(xm_ref, xh_ref, w_ref, b_ref, K=K, tile=tile)
    ym = y * mask_ref[...]                                  # precomputed 0/1 validity mask

    @pl.when(pl.program_id(1) == 0)
    def _init():
        stats_ref[...] = jnp.zeros_like(stats_ref)

    # TODO(synk): E[y^2]-E[y]^2 in f32 can cancel if |mean| >> std at extreme scales; switch to
    # a shifted/Welford accumulation if that regime ever matters.
    stats_ref[0, 0] = stats_ref[0, 0] + jnp.sum(ym, axis=1, keepdims=True)
    stats_ref[0, 1] = stats_ref[0, 1] + jnp.sum(ym * ym, axis=1, keepdims=True)


def _apply_kernel(xm_ref, xh_ref, w_ref, ss_ref, o_ref, b_ref, *, K, tile):
    """Pass 2: recompute conv tile, apply pre-folded BN scale/shift (per-channel FMA) + ReLU."""
    y = _conv_tile(xm_ref, xh_ref, w_ref, b_ref, K=K, tile=tile)
    o_ref[...] = jnp.maximum(y * ss_ref[0] + ss_ref[1], 0.0).astype(o_ref.dtype)


def conv_block_forward(x, w, b, gamma, beta, *, eps=1e-5, tile=1024,
                       compute_dtype=jnp.bfloat16):
    """x: (N, C_in, L) f32 -> (N, C_out, L) f32. Matches PyTorch ConvBlock (training-mode BN)."""
    del b  # conv bias is mathematically cancelled by train-mode BN mean subtraction
    assert tile >= 128 and tile % 128 == 0
    N, C_in, L = x.shape
    C_out, _, K = w.shape
    pad = (K - 1) // 2
    assert K == 2 * pad + 1, "only 'same'-style odd kernels (the module uses k=3, padding=1)"

    Lp = L + 2 * pad
    M_valid = N * Lp                       # padded-layout columns that carry conv outputs
    cin_p = _round_up(C_in, 8)
    cout_p = _round_up(C_out, 8)
    T = pl.cdiv(M_valid, tile)             # lane tiles carrying real data
    T_pad = _round_up(T, 2)                # even so pass 1 splits across 2 TensorCores (v7x)
    T_half = T_pad // 2
    M_grid = T * tile
    M_stats = T_pad * tile
    M_in = (T_pad + 1) * tile              # extra zero tile so the last tile's halo is in-bounds
    HB = tile // 128

    # Single padded, flattened input slab in HBM (compute dtype FIRST -> cheap layout passes).
    # Column j = n*Lp + m holds x_pad[n, :, m]; the conv output for (n, l) lives at column
    # n*Lp + l and only needs columns j..j+K-1 -> a pure lane shift inside the kernel.
    x2 = x.astype(compute_dtype)
    x2 = jnp.transpose(x2, (1, 0, 2))                                    # (C_in, N, L)
    x2 = jnp.pad(x2, ((0, cin_p - C_in), (0, 0), (pad, pad)))            # (cin_p, N, Lp)
    x2 = x2.reshape(cin_p, M_valid)
    x2 = jnp.pad(x2, ((0, 0), (0, M_in - M_valid)))

    # Conv weights, tap-major contraction: W2[o, k*cin_p + i] = w[o, i, k].
    w2 = jnp.transpose(w, (0, 2, 1))                                     # (C_out, K, C_in)
    w2 = jnp.pad(w2, ((0, cout_p - C_out), (0, 0), (0, cin_p - C_in)))
    w2 = w2.reshape(cout_p, K * cin_p).astype(compute_dtype)

    # Precomputed column-validity mask (avoids per-lane integer modulo inside pass 1).
    col = jnp.arange(M_stats, dtype=jnp.int32)
    mask = ((col < M_valid) & ((col % Lp) < L)).astype(jnp.float32).reshape(1, M_stats)

    scratch = [pltpu.VMEM((K * cin_p, tile), compute_dtype)]

    # ---- Pass 1: per-channel sum / sum-of-squares, one partial-stats slot per TensorCore. ----
    x_main1 = pl.BlockSpec((cin_p, tile), lambda c, t: (0, c * T_half + t))
    x_head1 = pl.BlockSpec((cin_p, 128), lambda c, t: (0, (c * T_half + t + 1) * HB))
    w_spec1 = pl.BlockSpec((cout_p, K * cin_p), lambda c, t: (0, 0))
    mask_spec = pl.BlockSpec((1, tile), lambda c, t: (0, c * T_half + t))
    stats_spec = pl.BlockSpec((1, 2, cout_p, 1), lambda c, t: (c, 0, 0, 0))

    partial_stats = pl.pallas_call(
        functools.partial(_stats_kernel, K=K, tile=tile),
        out_shape=jax.ShapeDtypeStruct((2, 2, cout_p, 1), jnp.float32),
        grid=(2, T_half),
        in_specs=[x_main1, x_head1, w_spec1, mask_spec],
        out_specs=stats_spec,
        scratch_shapes=scratch,
        compiler_params=pltpu.CompilerParams(
            dimension_semantics=("parallel", "arbitrary")),
    )(x2, x2, w2, mask)

    # Fold BN into a per-channel FMA ONCE in the wrapper (tiny XLA op) -> single (2,cout_p,1)
    # scale/shift operand; no per-tile rsqrt / stats stream in pass 2.
    stats = partial_stats.sum(axis=0)                                    # (2, cout_p, 1)
    inv_count = 1.0 / (N * L)
    mean = stats[0] * inv_count
    var = jnp.maximum(stats[1] * inv_count - mean * mean, 0.0)
    g = jnp.pad(gamma.astype(jnp.float32), (0, cout_p - C_out))[:, None]
    bt = jnp.pad(beta.astype(jnp.float32), (0, cout_p - C_out))[:, None]
    scale = g * lax.rsqrt(var + eps)
    shift = bt - mean * scale                                            # conv bias cancelled
    ss = jnp.stack([scale, shift])                                       # (2, cout_p, 1)

    # ---- Pass 2: recompute conv per tile, folded BN + ReLU, lane-dense bf16 stores. ----
    x_main2 = pl.BlockSpec((cin_p, tile), lambda t: (0, t))
    x_head2 = pl.BlockSpec((cin_p, 128), lambda t: (0, (t + 1) * HB))
    w_spec2 = pl.BlockSpec((cout_p, K * cin_p), lambda t: (0, 0))
    ss_spec = pl.BlockSpec((2, cout_p, 1), lambda t: (0, 0, 0))

    out2 = pl.pallas_call(
        functools.partial(_apply_kernel, K=K, tile=tile),
        out_shape=jax.ShapeDtypeStruct((cout_p, M_grid), compute_dtype),
        grid=(T,),
        in_specs=[x_main2, x_head2, w_spec2, ss_spec],
        out_specs=pl.BlockSpec((cout_p, tile), lambda t: (0, t)),
        scratch_shapes=scratch,
        compiler_params=pltpu.CompilerParams(dimension_semantics=("parallel",)),
    )(x2, x2, w2, ss)

    # Epilogue layout in compute dtype; cast back to the caller dtype last.
    out = out2[:C_out, :M_valid].reshape(C_out, N, Lp)[:, :, :L]
    return jnp.transpose(out, (1, 0, 2)).astype(x.dtype)


def reference_forward(x, w, b, gamma, beta, *, eps=1e-5):
    """Pure-JAX reference matching PyTorch ConvBlock.forward in training mode."""
    y = lax.conv_general_dilated(
        x, w, window_strides=(1,), padding=((1, 1),),
        dimension_numbers=("NCH", "OIH", "NCH"),
    )
    y = y + b[None, :, None]
    mean = y.mean(axis=(0, 2), keepdims=True)
    var = ((y - mean) ** 2).mean(axis=(0, 2), keepdims=True)
    y_hat = (y - mean) / jnp.sqrt(var + eps)
    return jnp.maximum(gamma[None, :, None] * y_hat + beta[None, :, None], 0.0)


if __name__ == "__main__":
    # Small, deterministic synthetic setup (no checkpoint loading).
    N, C_IN, C_OUT, L, K = 2, 4, 8, 16, 3

    key = jax.random.PRNGKey(0)
    kx, kw, kb, kg, kbeta = jax.random.split(key, 5)
    x = jax.random.normal(kx, (N, C_IN, L), dtype=jnp.float32)
    w = jax.random.normal(kw, (C_OUT, C_IN, K), dtype=jnp.float32) * 0.2
    b = jax.random.normal(kb, (C_OUT,), dtype=jnp.float32) * 0.1
    gamma = 1.0 + 0.1 * jax.random.normal(kg, (C_OUT,), dtype=jnp.float32)
    beta = 0.1 * jax.random.normal(kbeta, (C_OUT,), dtype=jnp.float32)

    ref = jax.block_until_ready(reference_forward(x, w, b, gamma, beta))

    # 1) f32 MXU path — tight numerical check.
    out_f32 = jax.block_until_ready(
        conv_block_forward(x, w, b, gamma, beta, compute_dtype=jnp.float32))
    assert out_f32.shape == (N, C_OUT, L), out_f32.shape
    assert jnp.allclose(out_f32, ref, rtol=1e-4, atol=1e-4), float(jnp.max(jnp.abs(out_f32 - ref)))

    # 2) default bf16 path (bf16 inputs, bf16 im2col, bf16 output) — bf16-rounding tolerance.
    out_bf16 = jax.block_until_ready(conv_block_forward(x, w, b, gamma, beta))
    assert out_bf16.shape == (N, C_OUT, L), out_bf16.shape
    assert jnp.allclose(out_bf16, ref, rtol=5e-2, atol=5e-2), float(jnp.max(jnp.abs(out_bf16 - ref)))

    # 3) multi-tile grid (4 lane tiles, 2-way core split of pass 1) to exercise the halo,
    #    validity-mask and partial-stats-reduction paths.
    L2 = 200
    x_big = jax.random.normal(kx, (N, C_IN, L2), dtype=jnp.float32)
    ref_big = jax.block_until_ready(reference_forward(x_big, w, b, gamma, beta))
    out_big = jax.block_until_ready(
        conv_block_forward(x_big, w, b, gamma, beta, tile=128, compute_dtype=jnp.float32))
    assert jnp.allclose(out_big, ref_big, rtol=1e-4, atol=1e-4), \
        float(jnp.max(jnp.abs(out_big - ref_big)))

    print("KERNEL_OK")
</pallas_src>

<mosaic_0001>
module attributes {stable_mosaic.version = 11 : i64} {
  func.func @_stats_kernel(%arg0: i32, %arg1: i32, %arg2: memref<8x1024xf32, #tpu.memory_space<vmem>>, %arg3: memref<8x128xf32, #tpu.memory_space<vmem>>, %arg4: memref<8x24xf32, #tpu.memory_space<vmem>>, %arg5: memref<1x1024xf32, #tpu.memory_space<vmem>>, %arg6: memref<1x2x8x1xf32, #tpu.memory_space<vmem>>, %arg7: memref<24x1024xf32, #tpu.memory_space<vmem>>) attributes {dimension_semantics = [#tpu.dimension_semantics<parallel>, #tpu.dimension_semantics<arbitrary>], iteration_bounds = array<i64: 2, 1>, scalar_prefetch = 0 : i64, scratch_operands = 1 : i64, tpu.core_type = #tpu.core_type<tc>, window_params = [{transform_indices = @transform_0, window_bounds = array<i64: 8, 1024>}, {transform_indices = @transform_1, window_bounds = array<i64: 8, 128>}, {pipeline_mode = #tpu.pipeline_mode<synchronous>, transform_indices = @transform_2, window_bounds = array<i64: 8, 24>}, {transform_indices = @transform_3, window_bounds = array<i64: 1, 1024>}, {transform_indices = @transform_4, window_bounds = array<i64: 1, 2, 8, 1>}]} {
    %c0 = arith.constant 0 : index
    %c0_0 = arith.constant 0 : index
    %0 = vector.load %arg2[%c0, %c0_0] : memref<8x1024xf32, #tpu.memory_space<vmem>>, vector<8x1024xf32>
    %c0_1 = arith.constant 0 : index
    %c0_2 = arith.constant 0 : index
    %1 = vector.load %arg7[%c0_1, %c0_2] : memref<24x1024xf32, #tpu.memory_space<vmem>>, vector<8x1024xf32>
    tpu.vector_store %arg7[%c0_1, %c0_2], %0 {strides = array<i32>} : memref<24x1024xf32, #tpu.memory_space<vmem>>, vector<8x1024xf32>,
    %c0_3 = arith.constant 0 : index
    %c1 = arith.constant 1 : index
    %2 = vector.load %arg2[%c0_3, %c1] : memref<8x1024xf32, #tpu.memory_space<vmem>>, vector<8x1023xf32>
    %c8 = arith.constant 8 : index
    %c0_4 = arith.constant 0 : index
    %3 = vector.load %arg7[%c8, %c0_4] : memref<24x1024xf32, #tpu.memory_space<vmem>>, vector<8x1023xf32>
    tpu.vector_store %arg7[%c8, %c0_4], %2 {strides = array<i32>} : memref<24x1024xf32, #tpu.memory_space<vmem>>, vector<8x1023xf32>,
    %c0_5 = arith.constant 0 : index
    %c0_6 = arith.constant 0 : index
    %4 = vector.load %arg3[%c0_5, %c0_6] : memref<8x128xf32, #tpu.memory_space<vmem>>, vector<8x1xf32>
    %c8_7 = arith.constant 8 : index
    %c1023 = arith.constant 1023 : index
    %5 = vector.load %arg7[%c8_7, %c1023] : memref<24x1024xf32, #tpu.memory_space<vmem>>, vector<8x1xf32>
    tpu.vector_store %arg7[%c8_7, %c1023], %4 {strides = array<i32>} : memref<24x1024xf32, #tpu.memory_space<vmem>>, vector<8x1xf32>,
    %c0_8 = arith.constant 0 : index
    %c2 = arith.constant 2 : index
    %6 = vector.load %arg2[%c0_8, %c2] : memref<8x1024xf32, #tpu.memory_space<vmem>>, vector<8x1022xf32>
    %c16 = arith.constant 16 : index
    %c0_9 = arith.constant 0 : index
    %7 = vector.load %arg7[%c16, %c0_9] : memref<24x1024xf32, #tpu.memory_space<vmem>>, vector<8x1022xf32>
    tpu.vector_store %arg7[%c16, %c0_9], %6 {strides = array<i32>} : memref<24x1024xf32, #tpu.memory_space<vmem>>, vector<8x1022xf32>,
    %c0_10 = arith.constant 0 : index
    %c0_11 = arith.constant 0 : index
    %8 = vector.load %arg3[%c0_10, %c0_11] : memref<8x128xf32, #tpu.memory_space<vmem>>, vector<8x2xf32>
    %c16_12 = arith.constant 16 : index
    %c1022 = arith.constant 1022 : index
    %9 = vector.load %arg7[%c16_12, %c1022] : memref<24x1024xf32, #tpu.memory_space<vmem>>, vector<8x2xf32>
    tpu.vector_store %arg7[%c16_12, %c1022], %8 {strides = array<i32>} : memref<24x1024xf32, #tpu.memory_space<vmem>>, vector<8x2xf32>,
    %c0_13 = arith.constant 0 : index
    %c0_14 = arith.constant 0 : index
    %10 = vector.load %arg4[%c0_13, %c0_14] : memref<8x24xf32, #tpu.memory_space<vmem>>, vector<8x24xf32>
    %c0_15 = arith.constant 0 : index
    %c0_16 = arith.constant 0 : index
    %11 = vector.load %arg7[%c0_15, %c0_16] : memref<24x1024xf32, #tpu.memory_space<vmem>>, vector<24x1024xf32>
    %cst = arith.constant dense<0.000000e+00> : vector<8x1024xf32>
    %12 = tpu.matmul %10, %11, %cst {dimension_numbers = #tpu.dot_dimension_numbers<[1], [0], [0], [1], [0, 0, 1, 1], [], []>} : vector<8x24xf32>, vector<24x1024xf32>, vector<8x1024xf32> -> vector<8x1024xf32>
    %c0_17 = arith.constant 0 : index
    %c0_18 = arith.constant 0 : index
    %13 = vector.load %arg5[%c0_17, %c0_18] : memref<1x1024xf32, #tpu.memory_space<vmem>>, vector<1x1024xf32>
    %14 = vector.broadcast %13 : vector<1x1024xf32> to vector<8x1024xf32>
    %15 = arith.mulf %12, %14 : vector<8x1024xf32>
    %c0_i32 = arith.constant 0 : i32
    %16 = arith.cmpi eq, %arg1, %c0_i32 : i32
    %17 = arith.extui %16 : i1 to i32
    %c0_i32_19 = arith.constant 0 : i32
    %18 = arith.cmpi ne, %17, %c0_i32_19 : i32
    scf.if %18 {
      %cst_38 = arith.constant 0.000000e+00 : f32
      %36 = vector.broadcast %cst_38 : f32 to vector<1x2x8x1xf32>
      %c0_39 = arith.constant 0 : index
      %c0_40 = arith.constant 0 : index
      %c0_41 = arith.constant 0 : index
      %c0_42 = arith.constant 0 : index
      %37 = vector.load %arg6[%c0_39, %c0_40, %c0_41, %c0_42] : memref<1x2x8x1xf32, #tpu.memory_space<vmem>>, vector<1x2x8x1xf32>
      tpu.vector_store %arg6[%c0_39, %c0_40, %c0_41, %c0_42], %36 {strides = array<i32>} : memref<1x2x8x1xf32, #tpu.memory_space<vmem>>, vector<1x2x8x1xf32>,
    } else {
    }
    %c0_20 = arith.constant 0 : index
    %c0_21 = arith.constant 0 : index
    %c0_22 = arith.constant 0 : index
    %c0_23 = arith.constant 0 : index
    %19 = vector.load %arg6[%c0_20, %c0_21, %c0_22, %c0_23] : memref<1x2x8x1xf32, #tpu.memory_space<vmem>>, vector<1x1x8x1xf32>
    %20 = vector.shape_cast %19 : vector<1x1x8x1xf32> to vector<8x1xf32>
    %cst_24 = arith.constant dense<0.000000e+00> : vector<8xf32>
    %21 = vector.multi_reduction <add>, %15, %cst_24 [1] : vector<8x1024xf32> to vector<8xf32>
    %22 = vector.shape_cast %21 : vector<8xf32> to vector<8x1xf32>
    %23 = arith.addf %20, %22 : vector<8x1xf32>
    %c0_25 = arith.constant 0 : index
    %c0_26 = arith.constant 0 : index
    %c0_27 = arith.constant 0 : index
    %c0_28 = arith.constant 0 : index
    %24 = vector.load %arg6[%c0_25, %c0_26, %c0_27, %c0_28] : memref<1x2x8x1xf32, #tpu.memory_space<vmem>>, vector<1x1x8x1xf32>
    %25 = vector.shape_cast %24 : vector<1x1x8x1xf32> to vector<8x1xf32>
    %26 = vector.shape_cast %23 : vector<8x1xf32> to vector<1x1x8x1xf32>
    tpu.vector_store %arg6[%c0_25, %c0_26, %c0_27, %c0_28], %26 {strides = array<i32>} : memref<1x2x8x1xf32, #tpu.memory_space<vmem>>, vector<1x1x8x1xf32>,
    %c0_29 = arith.constant 0 : index
    %c1_30 = arith.constant 1 : index
    %c0_31 = arith.constant 0 : index
    %c0_32 = arith.constant 0 : index
    %27 = vector.load %arg6[%c0_29, %c1_30, %c0_31, %c0_32] : memref<1x2x8x1xf32, #tpu.memory_space<vmem>>, vector<1x1x8x1xf32>
    %28 = vector.shape_cast %27 : vector<1x1x8x1xf32> to vector<8x1xf32>
    %29 = arith.mulf %15, %15 : vector<8x1024xf32>
    %cst_33 = arith.constant dense<0.000000e+00> : vector<8xf32>
    %30 = vector.multi_reduction <add>, %29, %cst_33 [1] : vector<8x1024xf32> to vector<8xf32>
    %31 = vector.shape_cast %30 : vector<8xf32> to vector<8x1xf32>
    %32 = arith.addf %28, %31 : vector<8x1xf32>
    %c0_34 = arith.constant 0 : index
    %c1_35 = arith.constant 1 : index
    %c0_36 = arith.constant 0 : index
    %c0_37 = arith.constant 0 : index
    %33 = vector.load %arg6[%c0_34, %c1_35, %c0_36, %c0_37] : memref<1x2x8x1xf32, #tpu.memory_space<vmem>>, vector<1x1x8x1xf32>
    %34 = vector.shape_cast %33 : vector<1x1x8x1xf32> to vector<8x1xf32>
    %35 = vector.shape_cast %32 : vector<8x1xf32> to vector<1x1x8x1xf32>
    tpu.vector_store %arg6[%c0_34, %c1_35, %c0_36, %c0_37], %35 {strides = array<i32>} : memref<1x2x8x1xf32, #tpu.memory_space<vmem>>, vector<1x1x8x1xf32>,
    return
  }
  func.func @transform_0(%arg0: i32, %arg1: i32) -> (i32, i32) {
    %c1_i32 = arith.constant 1 : i32
    %0 = arith.muli %arg0, %c1_i32 : i32
    %1 = arith.addi %0, %arg1 : i32
    %c0_i32 = arith.constant 0 : i32
    %c0_i32_0 = arith.constant 0 : i32
    return %c0_i32, %1 : i32, i32
  }
  func.func @transform_1(%arg0: i32, %arg1: i32) -> (i32, i32) {
    %c1_i32 = arith.constant 1 : i32
    %0 = arith.muli %arg0, %c1_i32 : i32
    %1 = arith.addi %0, %arg1 : i32
    %c1_i32_0 = arith.constant 1 : i32
    %2 = arith.addi %1, %c1_i32_0 : i32
    %c8_i32 = arith.constant 8 : i32
    %3 = arith.muli %2, %c8_i32 : i32
    %c0_i32 = arith.constant 0 : i32
    %c0_i32_1 = arith.constant 0 : i32
    return %c0_i32, %3 : i32, i32
  }
  func.func @transform_2(%arg0: i32, %arg1: i32) -> (i32, i32) {
    %c0_i32 = arith.constant 0 : i32
    %c0_i32_0 = arith.constant 0 : i32
    %c0_i32_1 = arith.constant 0 : i32
    return %c0_i32, %c0_i32_0 : i32, i32
  }
  func.func @transform_3(%arg0: i32, %arg1: i32) -> (i32, i32) {
    %c1_i32 = arith.constant 1 : i32
    %0 = arith.muli %arg0, %c1_i32 : i32
    %1 = arith.addi %0, %arg1 : i32
    %c0_i32 = arith.constant 0 : i32
    %c0_i32_0 = arith.constant 0 : i32
    return %c0_i32, %1 : i32, i32
  }
  func.func @transform_4(%arg0: i32, %arg1: i32) -> (i32, i32, i32, i32) {
    %c0_i32 = arith.constant 0 : i32
    %c0_i32_0 = arith.constant 0 : i32
    %c0_i32_1 = arith.constant 0 : i32
    %c0_i32_2 = arith.constant 0 : i32
    return %arg0, %c0_i32, %c0_i32_0, %c0_i32_1 : i32, i32, i32, i32
  }
}

</mosaic_0001>

<llo_original>
// kernel: tpu_custom_call.1
$region0: #{tpu_custom_call.1}
  #allocation0 [shape = 'u32[]', space=smem, size = 0x4, offset = 0x4, fixed_abs, tag = 'smem constant byte address 0x4 - core index']
  #allocation1 [shape = 'u32[144,128]{1,0:T(1,128)}', space=vmem, size = 0x12000, scoped, tag = 'internal scratch']
  #allocation2 [shape = 'f32[24,1024]{1,0:T(8,128)}', space=vmem, size = 0x18000, scoped, tag = 'scratch operand']
  %s0 = inlined_call_operand.hbm [shape: f32[8,3072], index: 0, kind: input, shape index: {}]
  %s1 = inlined_call_operand.hbm [shape: f32[8,3072], index: 1, kind: input, shape index: {}]
  %s2 = inlined_call_operand.hbm [shape: f32[8,24], index: 2, kind: input, shape index: {}]
  %s3 = inlined_call_operand.hbm [shape: f32[1,2048], index: 3, kind: input, shape index: {}]
  %s4 = inlined_call_operand.vmem [shape: f32[2,2,8,1], index: 4, kind: output, shape index: {}]
  %s5 = sld [smem:[#allocation0]]
  $region69: #{tpu_custom_call.1} parent=0
    _
  %s7 = ssub.s32 1, %s5
  %s8 = scalar_select 0, %s7, %s5
  $region1: #{tpu_custom_call.1} parent=0
    #allocation3 [shape = 'u8[65536]{0}', space=vmem, size = 0x10000, scoped, tag = 'input window, operand 0']
    #allocation4 [shape = 's32[2]{0}', space=sflag, size = 0x8, scoped, tag = 'scoped memory for tpu_custom_call.1']
    #allocation5 [shape = 'u8[8192]{0}', space=vmem, size = 0x2000, scoped, tag = 'input window, operand 1']
    #allocation6 [shape = 's32[2]{0}', space=sflag, size = 0x8, scoped, tag = 'scoped memory for tpu_custom_call.1']
    #allocation7 [shape = 'u8[4096]{0}', space=vmem, size = 0x1000, scoped, tag = 'input window, operand 2, single buffered']
    #allocation8 [shape = 'u8[8192]{0}', space=vmem, size = 0x2000, scoped, tag = 'input window, operand 3']
    #allocation9 [shape = 's32[2]{0}', space=sflag, size = 0x8, scoped, tag = 'scoped memory for tpu_custom_call.1']
    %9 = vsyncpa [#allocation4], 0
    %s10 = scalar_lea.sflag [#allocation4], 1
    %11 = vsyncpa %s10, 0
    %12 = vsyncpa [#allocation6], 0
    %s13 = scalar_lea.sflag [#allocation6], 1
    %14 = vsyncpa %s13, 0
    %15 = vsyncpa [#allocation9], 0
    %s16 = scalar_lea.sflag [#allocation9], 1
    %17 = vsyncpa %s16, 0
    loop: start=0, step=1, limit=4
    $region2: #{tpu_custom_call.1} parent=1 // loop_pre_header
      _
    $region3: #{tpu_custom_call.1} parent=1 // loop_header
      %s19 = sphi 0, %s23
      %p20 = scmp.ge.s32.totalorder %s19, 4
      %s26 = sphi 0, %s38
      %s27 = sphi 0, %s34
      %s28 = sphi 0, %s26
      %s29 = sphi 0, %s27
      %s30 = sphi 0, %s28
      %s31 = sphi 0, %s29
      %s43 = sphi 0, %s45
      %s46 = sphi 0, %s43
      %s47 = sphi 0, %s46
      %s63 = sphi 0, %s47
      %s75 = sphi 0, %s77
      %s78 = sphi 0, %s75
      %s79 = sphi 0, %s78
      %s95 = sphi 0, %s79
      %s99 = sphi 0, %s99
      %s101 = sphi 0, %s99
      %s102 = sphi 0, %s101
      %s116 = sphi 0, %s102
      %s124 = sphi 0, %s126
      %s127 = sphi 0, %s124
      %s128 = sphi 0, %s127
      %s144 = sphi 0, %s128
      %s150 = sphi 0, %s152
      %s153 = sphi 0, %s150
      %s154 = sphi 0, %s153
      %s170 = sphi 0, %s154
    $region4: #{tpu_custom_call.1} parent=1 // loop_header_branch
      %22 = sbr.rel (%p20) target = $region8
    $region5: #{tpu_custom_call.1} parent=1 // loop_body
      %s24 = ssub.s32 %s19, 1
      %s25 = ssub.s32 %s19, 2
      %s32 = sadd.s32 1, %s27
      %p33 = scmp.ge.s32.totalorder %s32, 1
      %s34 = scalar_select %p33, 0, %s32
      %s35 = sadd.s32 1, %s26
      %s36 = scalar_select %p33, %s35, %s26
      %p37 = scmp.ge.s32.totalorder %s36, 2
      %s38 = scalar_select %p37, 0, %s36
      %s39 = sadd.s32 %s26, %s27
      %s40 = sadd.s32 %s38, %s34
      %s41 = ssub.s32 %s39, %s40
      %p42 = scmp.eq.s32.totalorder %s41, 0
      %s44 = sadd.s32 %s43, 1
      %s45 = scalar_select %p42, %s43, %s44
      %p48 = pneg %p42
      %p49 = scmp.eq.s32.totalorder %s19, 1
      %p50 = por %p48, %p49
      %p51 = scmp.ne.s32.totalorder %s43, %s46
      %p52 = scmp.eq.s32.totalorder %s19, 0
      %p53 = por %p51, %p52
      %p54 = scmp.ne.s32.totalorder %s43, %s46
      %p55 = scmp.eq.s32.totalorder %s24, 1
      %p56 = por %p54, %p55
      %p57 = scmp.ne.s32.totalorder %s46, %s47
      %p58 = scmp.eq.s32.totalorder %s24, 0
      %p59 = por %p57, %p58
      %p60 = scmp.ne.s32.totalorder %s46, %s47
      %p61 = scmp.eq.s32.totalorder %s25, 1
      %p62 = por %p60, %p61
      %p64 = scmp.ne.s32.totalorder %s47, %s63
      %p65 = scmp.eq.s32.totalorder %s25, 0
      %p66 = por %p64, %p65
      %s67 = sadd.s32 %s26, %s27
      %s68 = sadd.s32 %s67, 1
      %s69 = smul.u32 %s68, 8
      %s70 = sadd.s32 %s38, %s34
      %s71 = sadd.s32 %s70, 1
      %s72 = smul.u32 %s71, 8
      %s73 = ssub.s32 %s69, %s72
      %p74 = scmp.eq.s32.totalorder %s73, 0
      %s76 = sadd.s32 %s75, 1
      %s77 = scalar_select %p74, %s75, %s76
      %p80 = pneg %p74
      %p81 = scmp.eq.s32.totalorder %s19, 1
      %p82 = por %p80, %p81
      %p83 = scmp.ne.s32.totalorder %s75, %s78
      %p84 = scmp.eq.s32.totalorder %s19, 0
      %p85 = por %p83, %p84
      %p86 = scmp.ne.s32.totalorder %s75, %s78
      %p87 = scmp.eq.s32.totalorder %s24, 1
      %p88 = por %p86, %p87
      %p89 = scmp.ne.s32.totalorder %s78, %s79
      %p90 = scmp.eq.s32.totalorder %s24, 0
      %p91 = por %p89, %p90
      %p92 = scmp.ne.s32.totalorder %s78, %s79
      %p93 = scmp.eq.s32.totalorder %s25, 1
      %p94 = por %p92, %p93
      %p96 = scmp.ne.s32.totalorder %s79, %s95
      %p97 = scmp.eq.s32.totalorder %s25, 0
      %p98 = por %p96, %p97
      %s100 = sadd.s32 %s99, 1
      %p103 = scmp.eq.s32.totalorder %s19, 1
      %p104 = scmp.ne.s32.totalorder %s99, %s101
      %p105 = scmp.eq.s32.totalorder %s19, 0
      %p106 = por %p104, %p105
      %p107 = scmp.ne.s32.totalorder %s99, %s101
      %p108 = scmp.eq.s32.totalorder %s24, 1
      %p109 = por %p107, %p108
      %p110 = scmp.ne.s32.totalorder %s101, %s102
      %p111 = scmp.eq.s32.totalorder %s24, 0
      %p112 = por %p110, %p111
      %p113 = scmp.ne.s32.totalorder %s101, %s102
      %p114 = scmp.eq.s32.totalorder %s25, 1
      %p115 = por %p113, %p114
      %p117 = scmp.ne.s32.totalorder %s102, %s116
      %p118 = scmp.eq.s32.totalorder %s25, 0
      %p119 = por %p117, %p118
      %s120 = sadd.s32 %s26, %s27
      %s121 = sadd.s32 %s38, %s34
      %s122 = ssub.s32 %s120, %s121
      %p123 = scmp.eq.s32.totalorder %s122, 0
      %s125 = sadd.s32 %s124, 1
      %s126 = scalar_select %p123, %s124, %s125
      %p129 = pneg %p123
      %p130 = scmp.eq.s32.totalorder %s19, 1
      %p131 = por %p129, %p130
      %p132 = scmp.ne.s32.totalorder %s124, %s127
      %p133 = scmp.eq.s32.totalorder %s19, 0
      %p134 = por %p132, %p133
      %p135 = scmp.ne.s32.totalorder %s124, %s127
      %p136 = scmp.eq.s32.totalorder %s24, 1
      %p137 = por %p135, %p136
      %p138 = scmp.ne.s32.totalorder %s127, %s128
      %p139 = scmp.eq.s32.totalorder %s24, 0
      %p140 = por %p138, %p139
      %p141 = scmp.ne.s32.totalorder %s127, %s128
      %p142 = scmp.eq.s32.totalorder %s25, 1
      %p143 = por %p141, %p142
      %p145 = scmp.ne.s32.totalorder %s128, %s144
      %p146 = scmp.eq.s32.totalorder %s25, 0
      %p147 = por %p145, %p146
      %s148 = ssub.s32 %s26, %s38
      %p149 = scmp.eq.s32.totalorder %s148, 0
      %s151 = sadd.s32 %s150, 1
      %s152 = scalar_select %p149, %s150, %s151
      %p155 = pneg %p149
      %p156 = scmp.eq.s32.totalorder %s19, 1
      %p157 = por %p155, %p156
      %p158 = scmp.ne.s32.totalorder %s150, %s153
      %p159 = scmp.eq.s32.totalorder %s19, 0
      %p160 = por %p158, %p159
      %p161 = scmp.ne.s32.totalorder %s150, %s153
      %p162 = scmp.eq.s32.totalorder %s24, 1
      %p163 = por %p161, %p162
      %p164 = scmp.ne.s32.totalorder %s153, %s154
      %p165 = scmp.eq.s32.totalorder %s24, 0
      %p166 = por %p164, %p165
      %p167 = scmp.ne.s32.totalorder %s153, %s154
      %p168 = scmp.eq.s32.totalorder %s25, 1
      %p169 = por %p167, %p168
      %p171 = scmp.ne.s32.totalorder %s154, %s170
      %p172 = scmp.eq.s32.totalorder %s25, 0
      %p173 = por %p171, %p172
      %p174 = scmp.le.s32.totalorder 1, %s19
      %p175 = scmp.lt.s32.totalorder %s19, 3
      %p176 = pnand %p174, %p175
      %p177 = pneg %p176
      // Predicated region
      $region9: #{tpu_custom_call.1} parent=5 // pred_check
        _
      $region10: #{tpu_custom_call.1} parent=5 // pred_check_branch
        %179 = sbr.rel (%p176) target = $region12
      $region11: #{tpu_custom_call.1} parent=5 // pred_region
        %s180 = ssub.s32 %s19, 1
        // Predicated region
        $region13: #{tpu_custom_call.1} parent=11 // pred_check
          %p181 = pneg %p112
        $region14: #{tpu_custom_call.1} parent=11 // pred_check_branch
          %183 = sbr.rel (%p181) target = $region16
        $region15: #{tpu_custom_call.1} parent=11 // pred_region
          %s185 = ssub.s32 128, 128
          %186 = vsyncadd [#allocation6], %s185
          %s188 = sshll.u32 [#allocation7], 4
          %s189 = int_to_ptr.vmem [resolvable:$true] %s188
          %191 = dma.hbm_to_vmem [thread:$0]  %s2, 128, %s189, [#allocation6]
        $region16: #{tpu_custom_call.1} parent=11 // pred_fallthru
          _
      $region12: #{tpu_custom_call.1} parent=5 // pred_fallthru
        _
      %p192 = scmp.lt.s32.totalorder %s19, 2
      // Predicated region
      $region17: #{tpu_custom_call.1} parent=5 // pred_check
        %p193 = pneg %p192
      $region18: #{tpu_custom_call.1} parent=5 // pred_check_branch
        %195 = sbr.rel (%p193) target = $region20
      $region19: #{tpu_custom_call.1} parent=5 // pred_region
        // Predicated region
        $region21: #{tpu_custom_call.1} parent=19 // pred_check
          %p196 = pneg %p53
        $region22: #{tpu_custom_call.1} parent=19 // pred_check_branch
          %198 = sbr.rel (%p196) target = $region24
        $region23: #{tpu_custom_call.1} parent=19 // pred_region
          %s199 = sand.u32 %s43, 1
          %s200 = scalar_lea.sflag [#allocation4], %s199
          %s201 = sand.u32 %s43, 1
          %s202 = smul.addr %s201, 64
          %s203 = scalar_lea.vmem [#allocation3], %s202
          %s204 = sadd.s32 %s26, %s27
          %s205 = smul.u32 8, %s204
          %s207 = ssub.s32 1024, 1024
          %208 = vsyncadd %s200, %s207
          %s209 = smul.addr %s205, 128
          %s210 = scalar_lea.hbm %s0, %s209
          %s212 = sshll.u32 %s203, 4
          %s213 = int_to_ptr.vmem [resolvable:$true] %s212
          %215 = dma.hbm_to_vmem [thread:$0]  %s210, 1024, %s213, %s200
        $region24: #{tpu_custom_call.1} parent=19 // pred_fallthru
          _
        // Predicated region
        $region25: #{tpu_custom_call.1} parent=19 // pred_check
          %p216 = pneg %p85
        $region26: #{tpu_custom_call.1} parent=19 // pred_check_branch
          %218 = sbr.rel (%p216) target = $region28
        $region27: #{tpu_custom_call.1} parent=19 // pred_region
          %s219 = sand.u32 %s19, 1
          %s220 = scalar_lea.sflag [#allocation6], %s219
          %s221 = sand.u32 %s75, 1
          %s222 = smul.addr %s221, 8
          %s223 = scalar_lea.vmem [#allocation5], %s222
          %s224 = sadd.s32 %s26, %s27
          %s225 = sadd.s32 %s224, 1
          %s226 = smul.u32 %s225, 8
          %s228 = ssub.s32 128, 128
          %229 = vsyncadd %s220, %s228
          %s230 = smul.addr %s226, 128
          %s231 = scalar_lea.hbm %s1, %s230
          %s233 = sshll.u32 %s223, 4
          %s234 = int_to_ptr.vmem [resolvable:$true] %s233
          %236 = dma.hbm_to_vmem [thread:$0]  %s231, 128, %s234, %s220
        $region28: #{tpu_custom_call.1} parent=19 // pred_fallthru
          _
        // Predicated region
        $region29: #{tpu_custom_call.1} parent=19 // pred_check
          %p237 = pneg %p134
        $region30: #{tpu_custom_call.1} parent=19 // pred_check_branch
          %239 = sbr.rel (%p237) target = $region32
        $region31: #{tpu_custom_call.1} parent=19 // pred_region
          %s240 = sand.u32 %s124, 1
          %s241 = scalar_lea.sflag [#allocation9], %s240
          %s242 = sand.u32 %s124, 1
          %s243 = smul.addr %s242, 8
          %s244 = scalar_lea.vmem [#allocation8], %s243
          %s245 = sadd.s32 %s26, %s27
          %s246 = smul.u32 8, %s245
          %s248 = ssub.s32 128, 128
          %249 = vsyncadd %s241, %s248
          %s250 = smul.addr %s246, 16
          %s251 = scalar_lea.hbm %s3, %s250
          %s253 = sshll.u32 %s244, 4
          %s254 = int_to_ptr.vmem [resolvable:$true] %s253
          %256 = dma.hbm_to_vmem [thread:$0]  %s251, 128, %s254, %s241
        $region32: #{tpu_custom_call.1} parent=19 // pred_fallthru
          _
      $region20: #{tpu_custom_call.1} parent=5 // pred_fallthru
        _
      %p257 = scmp.le.s32.totalorder 1, %s19
      %p258 = scmp.lt.s32.totalorder %s19, 3
      %p259 = pnand %p257, %p258
      %p260 = pneg %p259
      // Predicated region
      $region33: #{tpu_custom_call.1} parent=5 // pred_check
        _
      $region34: #{tpu_custom_call.1} parent=5 // pred_check_branch
        %262 = sbr.rel (%p259) target = $region36
      $region35: #{tpu_custom_call.1} parent=5 // pred_region
        %s263 = ssub.s32 %s19, 1
        %s264 = sand.u32 %s46, 1
        %s265 = scalar_lea.sflag [#allocation4], %s264
        %s266 = sand.u32 %s46, 1
        %s267 = smul.addr %s266, 64
        %s268 = scalar_lea.vmem [#allocation3], %s267
        // Predicated region
        $region37: #{tpu_custom_call.1} parent=35 // pred_check
          %p269 = pneg %p59
        $region38: #{tpu_custom_call.1} parent=35 // pred_check_branch
          %271 = sbr.rel (%p269) target = $region40
        $region39: #{tpu_custom_call.1} parent=35 // pred_region
          %272 = dma.done %s265, 1024
        $region40: #{tpu_custom_call.1} parent=35 // pred_fallthru
          _
        %s273 = sand.u32 %s24, 1
        %s274 = scalar_lea.sflag [#allocation6], %s273
        %s275 = sand.u32 %s78, 1
        %s276 = smul.addr %s275, 8
        %s277 = scalar_lea.vmem [#allocation5], %s276
        // Predicated region
        $region41: #{tpu_custom_call.1} parent=35 // pred_check
          %p278 = pneg %p91
        $region42: #{tpu_custom_call.1} parent=35 // pred_check_branch
          %280 = sbr.rel (%p278) target = $region44
        $region43: #{tpu_custom_call.1} parent=35 // pred_region
          %281 = dma.done %s274, 128
        $region44: #{tpu_custom_call.1} parent=35 // pred_fallthru
          _
        // Predicated region
        $region45: #{tpu_custom_call.1} parent=35 // pred_check
          %p282 = pneg %p112
        $region46: #{tpu_custom_call.1} parent=35 // pred_check_branch
          %284 = sbr.rel (%p282) target = $region48
        $region47: #{tpu_custom_call.1} parent=35 // pred_region
          %285 = dma.done [#allocation6], 128
        $region48: #{tpu_custom_call.1} parent=35 // pred_fallthru
          _
        %s286 = sand.u32 %s127, 1
        %s287 = scalar_lea.sflag [#allocation9], %s286
        %s288 = sand.u32 %s127, 1
        %s289 = smul.addr %s288, 8
        %s290 = scalar_lea.vmem [#allocation8], %s289
        // Predicated region
        $region49: #{tpu_custom_call.1} parent=35 // pred_check
          %p291 = pneg %p140
        $region50: #{tpu_custom_call.1} parent=35 // pred_check_branch
          %293 = sbr.rel (%p291) target = $region52
        $region51: #{tpu_custom_call.1} parent=35 // pred_region
          %294 = dma.done %s287, 128
        $region52: #{tpu_custom_call.1} parent=35 // pred_fallthru
          _
        %s295 = sand.u32 %s46, 1
        %s296 = scalar_lea.sflag [#allocation4], %s295
        %s297 = sand.u32 %s46, 1
        %s298 = smul.addr %s297, 64
        %s299 = scalar_lea.vmem [#allocation3], %s298
        %p300 = pneg %p59
        %p301 = pneg %p56
        %s302 = sand.u32 %s24, 1
        %s303 = scalar_lea.sflag [#allocation6], %s302
        %s304 = sand.u32 %s78, 1
        %s305 = smul.addr %s304, 8
        %s306 = scalar_lea.vmem [#allocation5], %s305
        %p307 = pneg %p91
        %p308 = pneg %p88
        %p309 = pneg %p112
        %p310 = pneg %p109
        %s311 = sand.u32 %s127, 1
        %s312 = scalar_lea.sflag [#allocation9], %s311
        %s313 = sand.u32 %s127, 1
        %s314 = smul.addr %s313, 8
        %s315 = scalar_lea.vmem [#allocation8], %s314
        %p316 = pneg %p140
        %p317 = pneg %p137
        %p318 = pneg %p166
        %p319 = pneg %p163
        %p320 = scmp.lt.s32.totalorder %s28, 1
        %s321 = scalar_select %p320, %s28, 1
        %s322 = smul.addr %s321, 2
        %s323 = smul.addr %s322, 8
        %s324 = scalar_lea.vmem %s4, %s323
        %s325 = sadd.s32 %s28, %s29
        %s326 = smul.u32 8, %s325
        %s327 = sadd.s32 %s28, %s29
        %s328 = sadd.s32 %s327, 1
        %s329 = smul.u32 %s328, 8
        %s330 = sadd.s32 %s28, %s29
        %s331 = smul.u32 8, %s330
        %p332 = scmp.lt.s32.totalorder %s28, 1
        %s333 = scalar_select %p332, %s28, 1
        %s334 = smul.addr %s333, 2
        %s335 = smul.addr %s334, 8
        %s336 = scalar_lea.vmem %s4, %s335
        %v337 = vld [vmem:[%s268] sm:$0xff]
        %v338 = vld [vmem:[%s268 + $0x8] sm:$0xff]
        %v339 = vld [vmem:[%s268 + $0x10] sm:$0xff]
        %v340 = vld [vmem:[%s268 + $0x18] sm:$0xff]
        %v341 = vld [vmem:[%s268 + $0x20] sm:$0xff]
        %v342 = vld [vmem:[%s268 + $0x28] sm:$0xff]
        %v343 = vld [vmem:[%s268 + $0x30] sm:$0xff]
        %v344 = vld [vmem:[%s268 + $0x38] sm:$0xff]
        %345 = vst [vmem:[#allocation2] sm:$0xff] %v337
        %346 = vst [vmem:[#allocation2 + $0x8] sm:$0xff] %v338
        %347 = vst [vmem:[#allocation2 + $0x10] sm:$0xff] %v339
        %348 = vst [vmem:[#allocation2 + $0x18] sm:$0xff] %v340
        %349 = vst [vmem:[#allocation2 + $0x20] sm:$0xff] %v341
        %350 = vst [vmem:[#allocation2 + $0x28] sm:$0xff] %v342
        %351 = vst [vmem:[#allocation2 + $0x30] sm:$0xff] %v343
        %352 = vst [vmem:[#allocation2 + $0x38] sm:$0xff] %v344
        %v353 = vld [vmem:[%s268] sm:$0xff]
        %v354 = vld [vmem:[%s268 + $0x8] sm:$0xff]
        %v355 = vld [vmem:[%s268 + $0x10] sm:$0xff]
        %v356 = vld [vmem:[%s268 + $0x18] sm:$0xff]
        %v357 = vld [vmem:[%s268 + $0x20] sm:$0xff]
        %v358 = vld [vmem:[%s268 + $0x28] sm:$0xff]
        %v359 = vld [vmem:[%s268 + $0x30] sm:$0xff]
        %v360 = vld [vmem:[%s268 + $0x38] sm:$0xff]
        %369 = vrot.lane.b32.xlu0 %v353, 127
        %v370 = vpop.permute.xlu0 %369
        %371 = vrot.lane.b32.xlu0 %v354, 127
        %v372 = vpop.permute.xlu0 %371
        %373 = vrot.lane.b32.xlu0 %v355, 127
        %v374 = vpop.permute.xlu0 %373
        %375 = vrot.lane.b32.xlu0 %v356, 127
        %v376 = vpop.permute.xlu0 %375
        %377 = vrot.lane.b32.xlu0 %v357, 127
        %v378 = vpop.permute.xlu0 %377
        %379 = vrot.lane.b32.xlu0 %v358, 127
        %v380 = vpop.permute.xlu0 %379
        %381 = vrot.lane.b32.xlu0 %v359, 127
        %v382 = vpop.permute.xlu0 %381
        %383 = vrot.lane.b32.xlu0 %v360, 127
        %v384 = vpop.permute.xlu0 %383
        %vm385 = vcmask 1039360
        %v386 = vsel %vm385, %v370, %v372
        %v387 = vsel %vm385, %v372, %v374
        %v388 = vsel %vm385, %v374, %v376
        %v389 = vsel %vm385, %v376, %v378
        %v390 = vsel %vm385, %v378, %v380
        %v391 = vsel %vm385, %v380, %v382
        %v392 = vsel %vm385, %v382, %v384
        %401 = vst [vmem:[#allocation2 + $0x40] sm:$0xff] %v386
        %402 = vst [vmem:[#allocation2 + $0x48] sm:$0xff] %v387
        %403 = vst [vmem:[#allocation2 + $0x50] sm:$0xff] %v388
        %404 = vst [vmem:[#allocation2 + $0x58] sm:$0xff] %v389
        %405 = vst [vmem:[#allocation2 + $0x60] sm:$0xff] %v390
        %406 = vst [vmem:[#allocation2 + $0x68] sm:$0xff] %v391
        %407 = vst [vmem:[#allocation2 + $0x70] sm:$0xff] %v392
        %408 = vst.msk [vmem:[#allocation2 + $0x78] sm:$0xff] %vm385, %v384
        %v409 = vld [vmem:[%s277] sm:$0xff]
        %411 = vrot.lane.b32.xlu0 %v409, 127
        %v412 = vpop.permute.xlu0 %411
        %vm414 = vcmask 1048568
        %415 = vst.msk [vmem:[#allocation2 + $0x78] sm:$0xff] %vm414, %v412
        %v416 = vld [vmem:[%s268] sm:$0xff]
        %v417 = vld [vmem:[%s268 + $0x8] sm:$0xff]
        %v418 = vld [vmem:[%s268 + $0x10] sm:$0xff]
        %v419 = vld [vmem:[%s268 + $0x18] sm:$0xff]
        %v420 = vld [vmem:[%s268 + $0x20] sm:$0xff]
        %v421 = vld [vmem:[%s268 + $0x28] sm:$0xff]
        %v422 = vld [vmem:[%s268 + $0x30] sm:$0xff]
        %v423 = vld [vmem:[%s268 + $0x38] sm:$0xff]
        %432 = vrot.lane.b32.xlu0 %v416, 126
        %v433 = vpop.permute.xlu0 %432
        %434 = vrot.lane.b32.xlu0 %v417, 126
        %v435 = vpop.permute.xlu0 %434
        %436 = vrot.lane.b32.xlu0 %v418, 126
        %v437 = vpop.permute.xlu0 %436
        %438 = vrot.lane.b32.xlu0 %v419, 126
        %v439 = vpop.permute.xlu0 %438
        %440 = vrot.lane.b32.xlu0 %v420, 126
        %v441 = vpop.permute.xlu0 %440
        %442 = vrot.lane.b32.xlu0 %v421, 126
        %v443 = vpop.permute.xlu0 %442
        %444 = vrot.lane.b32.xlu0 %v422, 126
        %v445 = vpop.permute.xlu0 %444
        %446 = vrot.lane.b32.xlu0 %v423, 126
        %v447 = vpop.permute.xlu0 %446
        %vm448 = vcmask 1031168
        %v449 = vsel %vm448, %v433, %v435
        %v450 = vsel %vm448, %v435, %v437
        %v451 = vsel %vm448, %v437, %v439
        %v452 = vsel %vm448, %v439, %v441
        %v453 = vsel %vm448, %v441, %v443
        %v454 = vsel %vm448, %v443, %v445
        %v455 = vsel %vm448, %v445, %v447
        %464 = vst [vmem:[#allocation2 + $0x80] sm:$0xff] %v449
        %465 = vst [vmem:[#allocation2 + $0x88] sm:$0xff] %v450
        %466 = vst [vmem:[#allocation2 + $0x90] sm:$0xff] %v451
        %467 = vst [vmem:[#allocation2 + $0x98] sm:$0xff] %v452
        %468 = vst [vmem:[#allocation2 + $0xa0] sm:$0xff] %v453
        %469 = vst [vmem:[#allocation2 + $0xa8] sm:$0xff] %v454
        %470 = vst [vmem:[#allocation2 + $0xb0] sm:$0xff] %v455
        %471 = vst.msk [vmem:[#allocation2 + $0xb8] sm:$0xff] %vm448, %v447
        %v472 = vld [vmem:[%s277] sm:$0xff]
        %474 = vrot.lane.b32.xlu0 %v472, 126
        %v475 = vpop.permute.xlu0 %474
        %vm477 = vcmask 1048560
        %478 = vst.msk [vmem:[#allocation2 + $0xb8] sm:$0xff] %vm477, %v475
        %v479 = vld [vmem:[#allocation7] sm:$0xff]
        %v480 = vld [vmem:[#allocation2] sm:$0xff]
        %v481 = vld [vmem:[#allocation2 + $0x8] sm:$0xff]
        %v482 = vld [vmem:[#allocation2 + $0x10] sm:$0xff]
        %v483 = vld [vmem:[#allocation2 + $0x18] sm:$0xff]
        %v484 = vld [vmem:[#allocation2 + $0x20] sm:$0xff]
        %v485 = vld [vmem:[#allocation2 + $0x28] sm:$0xff]
        %v486 = vld [vmem:[#allocation2 + $0x30] sm:$0xff]
        %v487 = vld [vmem:[#allocation2 + $0x38] sm:$0xff]
        %v488 = vld [vmem:[#allocation2 + $0x40] sm:$0xff]
        %v489 = vld [vmem:[#allocation2 + $0x48] sm:$0xff]
        %v490 = vld [vmem:[#allocation2 + $0x50] sm:$0xff]
        %v491 = vld [vmem:[#allocation2 + $0x58] sm:$0xff]
        %v492 = vld [vmem:[#allocation2 + $0x60] sm:$0xff]
        %v493 = vld [vmem:[#allocation2 + $0x68] sm:$0xff]
        %v494 = vld [vmem:[#allocation2 + $0x70] sm:$0xff]
        %v495 = vld [vmem:[#allocation2 + $0x78] sm:$0xff]
        %v496 = vld [vmem:[#allocation2 + $0x80] sm:$0xff]
        %v497 = vld [vmem:[#allocation2 + $0x88] sm:$0xff]
        %v498 = vld [vmem:[#allocation2 + $0x90] sm:$0xff]
        %v499 = vld [vmem:[#allocation2 + $0x98] sm:$0xff]
        %v500 = vld [vmem:[#allocation2 + $0xa0] sm:$0xff]
        %v501 = vld [vmem:[#allocation2 + $0xa8] sm:$0xff]
        %v502 = vld [vmem:[#allocation2 + $0xb0] sm:$0xff]
        %v503 = vld [vmem:[#allocation2 + $0xb8] sm:$0xff]
        %vm504 = vcmask 195584
        %v506 = vsel %vm504, %v479, 0
        %508 = vmatprep.subr.mxu0 %v481
        %509 = vmatpush1.msra.mxu0 %v480
        %510 = vmatprep.subr.mxu0 %v489
        %511 = vmatpush1.msra.mxu0 %v488
        %512 = vmatprep.subr.mxu0 %v497
        %513 = vmatpush1.msra.mxu0 %v496
        %514 = vmatprep.subr.mxu0 0.0
        %515 = vmatpush1.msra.mxu0 0.0
        %516 = vmatprep.subr.mxu0 0.0
        %517 = vmatpush1.msra.mxu0 0.0
        %518 = vmatprep.subr.mxu0 0.0
        %519 = vmatpush1.msra.mxu0 0.0
        %520 = vmatprep.subr.mxu0 0.0
        %521 = vmatpush1.msra.mxu0 0.0
        %522 = vmatprep.subr.mxu0 0.0
        %523 = vmatpush1.msra.mxu0 0.0
        %524 = vmatprep.subr.mxu0 0.0
        %525 = vmatpush1.msra.mxu0 0.0
        %526 = vmatprep.subr.mxu0 0.0
        %527 = vmatpush1.msra.mxu0 0.0
        %528 = vmatprep.subr.mxu0 0.0
        %529 = vmatpush1.msra.mxu0 0.0
        %530 = vmatprep.subr.mxu0 0.0
        %531 = vmatpush1.msra.mxu0 0.0
        %532 = vmatprep.subr.mxu0 0.0
        %533 = vmatpush1.msra.mxu0 0.0
        %534 = vmatprep.subr.mxu0 0.0
        %535 = vmatpush1.msra.mxu0 0.0
        %536 = vmatprep.subr.mxu0 0.0
        %537 = vmatpush1.msra.mxu0 0.0
        %538 = vmatprep.subr.mxu0 0.0
        %539 = vmatpush1.msra.mxu0 0.0
        %540 = vmatprep.subr.mxu0 0.0
        %541 = vmatpush1.msra.mxu0 0.0
        %542 = vmatprep.subr.mxu0 0.0
        %543 = vmatpush1.msra.mxu0 0.0
        %544 = vmatprep.subr.mxu0 0.0
        %545 = vmatpush1.msra.mxu0 0.0
        %546 = vmatprep.subr.mxu0 0.0
        %547 = vmatpush1.msra.mxu0 0.0
        %548 = vmatprep.subr.mxu0 0.0
        %549 = vmatpush1.msra.mxu0 0.0
        %550 = vmatprep.subr.mxu0 0.0
        %551 = vmatpush1.msra.mxu0 0.0
        %552 = vmatprep.subr.mxu0 0.0
        %553 = vmatpush1.msra.mxu0 0.0
        %554 = vmatprep.subr.mxu0 0.0
        %555 = vmatpush1.msra.mxu0 0.0
        %556 = vmatprep.subr.mxu0 0.0
        %557 = vmatpush1.msra.mxu0 0.0
        %558 = vmatprep.subr.mxu0 0.0
        %559 = vmatpush1.msra.mxu0 0.0
        %560 = vmatprep.subr.mxu0 0.0
        %561 = vmatpush1.msra.mxu0 0.0
        %562 = vmatprep.subr.mxu0 0.0
        %563 = vmatpush1.msra.mxu0 0.0
        %564 = vmatprep.subr.mxu0 0.0
        %565 = vmatpush1.msra.mxu0 0.0
        %566 = vmatprep.subr.mxu0 0.0
        %567 = vmatpush1.msra.mxu0 0.0
        %568 = vmatprep.subr.mxu0 0.0
        %569 = vmatpush1.msra.mxu0 0.0
        %570 = vmatprep.subr.mxu0 0.0
        %571 = vmatpush1.msra.mxu0 0.0
        %572 = vmatprep.mubr.f32.mxu0 0.0
        %573 = vmatmul.mubr.f32.gmra.mrb[0].mxu0 %v506
        %v574 = vpop.f32.mrb[0].mxu0
        %v575 = vadd.f32 0.0, %v574
        %v576 = vpop.f32.mrb[0].mxu0
        %v577 = vadd.f32 0.0, %v576
        %578 = vdwg.mxu0
        %579 = vmatprep.subr.mxu0 %v483
        %580 = vmatpush1.msra.mxu0 %v482
        %581 = vmatprep.subr.mxu0 %v491
        %582 = vmatpush1.msra.mxu0 %v490
        %583 = vmatprep.subr.mxu0 %v499
        %584 = vmatpush1.msra.mxu0 %v498
        %585 = vmatprep.subr.mxu0 0.0
        %586 = vmatpush1.msra.mxu0 0.0
        %587 = vmatprep.subr.mxu0 0.0
        %588 = vmatpush1.msra.mxu0 0.0
        %589 = vmatprep.subr.mxu0 0.0
        %590 = vmatpush1.msra.mxu0 0.0
        %591 = vmatprep.subr.mxu0 0.0
        %592 = vmatpush1.msra.mxu0 0.0
        %593 = vmatprep.subr.mxu0 0.0
        %594 = vmatpush1.msra.mxu0 0.0
        %595 = vmatprep.subr.mxu0 0.0
        %596 = vmatpush1.msra.mxu0 0.0
        %597 = vmatprep.subr.mxu0 0.0
        %598 = vmatpush1.msra.mxu0 0.0
        %599 = vmatprep.subr.mxu0 0.0
        %600 = vmatpush1.msra.mxu0 0.0
        %601 = vmatprep.subr.mxu0 0.0
        %602 = vmatpush1.msra.mxu0 0.0
        %603 = vmatprep.subr.mxu0 0.0
        %604 = vmatpush1.msra.mxu0 0.0
        %605 = vmatprep.subr.mxu0 0.0
        %606 = vmatpush1.msra.mxu0 0.0
        %607 = vmatprep.subr.mxu0 0.0
        %608 = vmatpush1.msra.mxu0 0.0
        %609 = vmatprep.subr.mxu0 0.0
        %610 = vmatpush1.msra.mxu0 0.0
        %611 = vmatprep.subr.mxu0 0.0
        %612 = vmatpush1.msra.mxu0 0.0
        %613 = vmatprep.subr.mxu0 0.0
        %614 = vmatpush1.msra.mxu0 0.0
        %615 = vmatprep.subr.mxu0 0.0
        %616 = vmatpush1.msra.mxu0 0.0
        %617 = vmatprep.subr.mxu0 0.0
        %618 = vmatpush1.msra.mxu0 0.0
        %619 = vmatprep.subr.mxu0 0.0
        %620 = vmatpush1.msra.mxu0 0.0
        %621 = vmatprep.subr.mxu0 0.0
        %622 = vmatpush1.msra.mxu0 0.0
        %623 = vmatprep.subr.mxu0 0.0
        %624 = vmatpush1.msra.mxu0 0.0
        %625 = vmatprep.subr.mxu0 0.0
        %626 = vmatpush1.msra.mxu0 0.0
        %627 = vmatprep.subr.mxu0 0.0
        %628 = vmatpush1.msra.mxu0 0.0
        %629 = vmatprep.subr.mxu0 0.0
        %630 = vmatpush1.msra.mxu0 0.0
        %631 = vmatprep.subr.mxu0 0.0
        %632 = vmatpush1.msra.mxu0 0.0
        %633 = vmatprep.subr.mxu0 0.0
        %634 = vmatpush1.msra.mxu0 0.0
        %635 = vmatprep.subr.mxu0 0.0
        %636 = vmatpush1.msra.mxu0 0.0
        %637 = vmatprep.subr.mxu0 0.0
        %638 = vmatpush1.msra.mxu0 0.0
        %639 = vmatprep.subr.mxu0 0.0
        %640 = vmatpush1.msra.mxu0 0.0
        %641 = vmatprep.subr.mxu0 0.0
        %642 = vmatpush1.msra.mxu0 0.0
        %643 = vmatprep.mubr.f32.mxu0 0.0
        %644 = vmatmul.mubr.f32.gmra.mrb[0].mxu0 %v506
        %v645 = vpop.f32.mrb[0].mxu0
        %v646 = vadd.f32 0.0, %v645
        %v647 = vpop.f32.mrb[0].mxu0
        %v648 = vadd.f32 0.0, %v647
        %649 = vdwg.mxu0
        %650 = vmatprep.subr.mxu0 %v485
        %651 = vmatpush1.msra.mxu0 %v484
        %652 = vmatprep.subr.mxu0 %v493
        %653 = vmatpush1.msra.mxu0 %v492
        %654 = vmatprep.subr.mxu0 %v501
        %655 = vmatpush1.msra.mxu0 %v500
        %656 = vmatprep.subr.mxu0 0.0
        %657 = vmatpush1.msra.mxu0 0.0
        %658 = vmatprep.subr.mxu0 0.0
        %659 = vmatpush1.msra.mxu0 0.0
        %660 = vmatprep.subr.mxu0 0.0
        %661 = vmatpush1.msra.mxu0 0.0
        %662 = vmatprep.subr.mxu0 0.0
        %663 = vmatpush1.msra.mxu0 0.0
        %664 = vmatprep.subr.mxu0 0.0
        %665 = vmatpush1.msra.mxu0 0.0
        %666 = vmatprep.subr.mxu0 0.0
        %667 = vmatpush1.msra.mxu0 0.0
        %668 = vmatprep.subr.mxu0 0.0
        %669 = vmatpush1.msra.mxu0 0.0
        %670 = vmatprep.subr.mxu0 0.0
        %671 = vmatpush1.msra.mxu0 0.0
        %672 = vmatprep.subr.mxu0 0.0
        %673 = vmatpush1.msra.mxu0 0.0
        %674 = vmatprep.subr.mxu0 0.0
        %675 = vmatpush1.msra.mxu0 0.0
        %676 = vmatprep.subr.mxu0 0.0
        %677 = vmatpush1.msra.mxu0 0.0
        %678 = vmatprep.subr.mxu0 0.0
        %679 = vmatpush1.msra.mxu0 0.0
        %680 = vmatprep.subr.mxu0 0.0
        %681 = vmatpush1.msra.mxu0 0.0
        %682 = vmatprep.subr.mxu0 0.0
        %683 = vmatpush1.msra.mxu0 0.0
        %684 = vmatprep.subr.mxu0 0.0
        %685 = vmatpush1.msra.mxu0 0.0
        %686 = vmatprep.subr.mxu0 0.0
        %687 = vmatpush1.msra.mxu0 0.0
        %688 = vmatprep.subr.mxu0 0.0
        %689 = vmatpush1.msra.mxu0 0.0
        %690 = vmatprep.subr.mxu0 0.0
        %691 = vmatpush1.msra.mxu0 0.0
        %692 = vmatprep.subr.mxu0 0.0
        %693 = vmatpush1.msra.mxu0 0.0
        %694 = vmatprep.subr.mxu0 0.0
        %695 = vmatpush1.msra.mxu0 0.0
        %696 = vmatprep.subr.mxu0 0.0
        %697 = vmatpush1.msra.mxu0 0.0
        %698 = vmatprep.subr.mxu0 0.0
        %699 = vmatpush1.msra.mxu0 0.0
        %700 = vmatprep.subr.mxu0 0.0
        %701 = vmatpush1.msra.mxu0 0.0
        %702 = vmatprep.subr.mxu0 0.0
        %703 = vmatpush1.msra.mxu0 0.0
        %704 = vmatprep.subr.mxu0 0.0
        %705 = vmatpush1.msra.mxu0 0.0
        %706 = vmatprep.subr.mxu0 0.0
        %707 = vmatpush1.msra.mxu0 0.0
        %708 = vmatprep.subr.mxu0 0.0
        %709 = vmatpush1.msra.mxu0 0.0
        %710 = vmatprep.subr.mxu0 0.0
        %711 = vmatpush1.msra.mxu0 0.0
        %712 = vmatprep.subr.mxu0 0.0
        %713 = vmatpush1.msra.mxu0 0.0
        %714 = vmatprep.mubr.f32.mxu0 0.0
        %715 = vmatmul.mubr.f32.gmra.mrb[0].mxu0 %v506
        %v716 = vpop.f32.mrb[0].mxu0
        %v717 = vadd.f32 0.0, %v716
        %v718 = vpop.f32.mrb[0].mxu0
        %v719 = vadd.f32 0.0, %v718
        %720 = vdwg.mxu0
        %721 = vmatprep.subr.mxu0 %v487
        %722 = vmatpush1.msra.mxu0 %v486
        %723 = vmatprep.subr.mxu0 %v495
        %724 = vmatpush1.msra.mxu0 %v494
        %725 = vmatprep.subr.mxu0 %v503
        %726 = vmatpush1.msra.mxu0 %v502
        %727 = vmatprep.subr.mxu0 0.0
        %728 = vmatpush1.msra.mxu0 0.0
        %729 = vmatprep.subr.mxu0 0.0
        %730 = vmatpush1.msra.mxu0 0.0
        %731 = vmatprep.subr.mxu0 0.0
        %732 = vmatpush1.msra.mxu0 0.0
        %733 = vmatprep.subr.mxu0 0.0
        %734 = vmatpush1.msra.mxu0 0.0
        %735 = vmatprep.subr.mxu0 0.0
        %736 = vmatpush1.msra.mxu0 0.0
        %737 = vmatprep.subr.mxu0 0.0
        %738 = vmatpush1.msra.mxu0 0.0
        %739 = vmatprep.subr.mxu0 0.0
        %740 = vmatpush1.msra.mxu0 0.0
        %741 = vmatprep.subr.mxu0 0.0
        %742 = vmatpush1.msra.mxu0 0.0
        %743 = vmatprep.subr.mxu0 0.0
        %744 = vmatpush1.msra.mxu0 0.0
        %745 = vmatprep.subr.mxu0 0.0
        %746 = vmatpush1.msra.mxu0 0.0
        %747 = vmatprep.subr.mxu0 0.0
        %748 = vmatpush1.msra.mxu0 0.0
        %749 = vmatprep.subr.mxu0 0.0
        %750 = vmatpush1.msra.mxu0 0.0
        %751 = vmatprep.subr.mxu0 0.0
        %752 = vmatpush1.msra.mxu0 0.0
        %753 = vmatprep.subr.mxu0 0.0
        %754 = vmatpush1.msra.mxu0 0.0
        %755 = vmatprep.subr.mxu0 0.0
        %756 = vmatpush1.msra.mxu0 0.0
        %757 = vmatprep.subr.mxu0 0.0
        %758 = vmatpush1.msra.mxu0 0.0
        %759 = vmatprep.subr.mxu0 0.0
        %760 = vmatpush1.msra.mxu0 0.0
        %761 = vmatprep.subr.mxu0 0.0
        %762 = vmatpush1.msra.mxu0 0.0
        %763 = vmatprep.subr.mxu0 0.0
        %764 = vmatpush1.msra.mxu0 0.0
        %765 = vmatprep.subr.mxu0 0.0
        %766 = vmatpush1.msra.mxu0 0.0
        %767 = vmatprep.subr.mxu0 0.0
        %768 = vmatpush1.msra.mxu0 0.0
        %769 = vmatprep.subr.mxu0 0.0
        %770 = vmatpush1.msra.mxu0 0.0
        %771 = vmatprep.subr.mxu0 0.0
        %772 = vmatpush1.msra.mxu0 0.0
        %773 = vmatprep.subr.mxu0 0.0
        %774 = vmatpush1.msra.mxu0 0.0
        %775 = vmatprep.subr.mxu0 0.0
        %776 = vmatpush1.msra.mxu0 0.0
        %777 = vmatprep.subr.mxu0 0.0
        %778 = vmatpush1.msra.mxu0 0.0
        %779 = vmatprep.subr.mxu0 0.0
        %780 = vmatpush1.msra.mxu0 0.0
        %781 = vmatprep.subr.mxu0 0.0
        %782 = vmatpush1.msra.mxu0 0.0
        %783 = vmatprep.subr.mxu0 0.0
        %784 = vmatpush1.msra.mxu0 0.0
        %785 = vmatprep.mubr.f32.mxu0 0.0
        %786 = vmatmul.mubr.f32.gmra.mrb[0].mxu0 %v506
        %v787 = vpop.f32.mrb[0].mxu0
        %v788 = vadd.f32 0.0, %v787
        %v789 = vpop.f32.mrb[0].mxu0
        %v790 = vadd.f32 0.0, %v789
        %791 = vdwg.mxu0
        %v792 = vld [vmem:[%s290] sm:$0xff]
        %v794 = vlaneseq
        %v795 = vshrl.u32 %v794, 7
        %v796 = vsub.s32 0, %v795
        %v797 = vrot.slane %v792, %v796
        %v798 = vlaneseq
        %v799 = vshrl.u32 %v798, 7
        %v800 = vsub.s32 1, %v799
        %v801 = vrot.slane %v792, %v800
        %v802 = vlaneseq
        %v803 = vshrl.u32 %v802, 7
        %v804 = vsub.s32 2, %v803
        %v805 = vrot.slane %v792, %v804
        %v806 = vlaneseq
        %v807 = vshrl.u32 %v806, 7
        %v808 = vsub.s32 3, %v807
        %v809 = vrot.slane %v792, %v808
        %v810 = vlaneseq
        %v811 = vshrl.u32 %v810, 7
        %v812 = vsub.s32 4, %v811
        %v813 = vrot.slane %v792, %v812
        %v814 = vlaneseq
        %v815 = vshrl.u32 %v814, 7
        %v816 = vsub.s32 5, %v815
        %v817 = vrot.slane %v792, %v816
        %v818 = vlaneseq
        %v819 = vshrl.u32 %v818, 7
        %v820 = vsub.s32 6, %v819
        %v821 = vrot.slane %v792, %v820
        %v822 = vlaneseq
        %v823 = vshrl.u32 %v822, 7
        %v824 = vsub.s32 7, %v823
        %v825 = vrot.slane %v792, %v824
        %v834 = vmul.f32 %v575, %v797
        %v835 = vmul.f32 %v577, %v801
        %v836 = vmul.f32 %v646, %v805
        %v837 = vmul.f32 %v648, %v809
        %v838 = vmul.f32 %v717, %v813
        %v839 = vmul.f32 %v719, %v817
        %v840 = vmul.f32 %v788, %v821
        %v841 = vmul.f32 %v790, %v825
        %p842 = scmp.eq.s32.totalorder %s29, 0
        // Predicated region
        $region53: #{tpu_custom_call.1} parent=35 // pred_check
          %p843 = pneg %p842
        $region54: #{tpu_custom_call.1} parent=35 // pred_check_branch
          %845 = sbr.rel (%p843) target = $region56
        $region55: #{tpu_custom_call.1} parent=35 // pred_region
          %vm846 = vcmask 7168
          %847 = vst.msk [vmem:[%s336] sm:$0xff] %vm846, 0.0
          %848 = vst.msk [vmem:[%s336 + $0x8] sm:$0xff] %vm846, 0.0
        $region56: #{tpu_custom_call.1} parent=35 // pred_fallthru
          _
        %v849 = vld [vmem:[%s336] sm:$0xff]
        %v850 = vadd.f32 %v834, %v835
        %v851 = vadd.f32 %v850, %v836
        %v852 = vadd.f32 %v851, %v837
        %v853 = vadd.f32 %v852, %v838
        %v854 = vadd.f32 %v853, %v839
        %v855 = vadd.f32 %v854, %v840
        %v856 = vadd.f32 %v855, %v841
        %857 = vadd.xlane.f32.xlu0 %v856
        %v858 = vpop.xlane.xlu0 %857
        %v859 = vadd.f32 %v849, %v858
        %vm860 = vcmask 7168
        %861 = vst.msk [vmem:[%s336] sm:$0xff] %vm860, %v859
        %s862 = scalar_lea.vmem %s336, 8
        %v863 = vld [vmem:[%s862] sm:$0xff]
        %v864 = vmul.f32 %v834, %v834
        %v865 = vmul.f32 %v835, %v835
        %v866 = vmul.f32 %v836, %v836
        %v867 = vmul.f32 %v837, %v837
        %v868 = vmul.f32 %v838, %v838
        %v869 = vmul.f32 %v839, %v839
        %v870 = vmul.f32 %v840, %v840
        %v871 = vmul.f32 %v841, %v841
        %v872 = vadd.f32 %v864, %v865
        %v873 = vadd.f32 %v872, %v866
        %v874 = vadd.f32 %v873, %v867
        %v875 = vadd.f32 %v874, %v868
        %v876 = vadd.f32 %v875, %v869
        %v877 = vadd.f32 %v876, %v870
        %v878 = vadd.f32 %v877, %v871
        %879 = vadd.xlane.f32.xlu0 %v878
        %v880 = vpop.xlane.xlu0 %879
        %v881 = vadd.f32 %v863, %v880
        %882 = vst.msk [vmem:[%s862] sm:$0xff] %vm860, %v881
        %p883 = scmp.lt.s32.totalorder %s28, 1
        %s884 = scalar_select %p883, %s28, 1
        %s885 = smul.addr %s884, 2
        %s886 = smul.addr %s885, 8
        %s887 = scalar_lea.vmem %s4, %s886
        // Predicated region
        $region57: #{tpu_custom_call.1} parent=35 // pred_check
          %p888 = pneg %p163
        $region58: #{tpu_custom_call.1} parent=35 // pred_check_branch
          %890 = sbr.rel (%p888) target = $region60
        $region59: #{tpu_custom_call.1} parent=35 // pred_region
          _
        $region60: #{tpu_custom_call.1} parent=35 // pred_fallthru
          _
      $region36: #{tpu_custom_call.1} parent=5 // pred_fallthru
        _
      %p891 = scmp.le.s32.totalorder 2, %s19
      // Predicated region
      $region61: #{tpu_custom_call.1} parent=5 // pred_check
        %p892 = pneg %p891
      $region62: #{tpu_custom_call.1} parent=5 // pred_check_branch
        %894 = sbr.rel (%p892) target = $region64
      $region63: #{tpu_custom_call.1} parent=5 // pred_region
        %s895 = ssub.s32 %s19, 2
        // Predicated region
        $region65: #{tpu_custom_call.1} parent=63 // pred_check
          %p896 = pneg %p169
        $region66: #{tpu_custom_call.1} parent=63 // pred_check_branch
          %898 = sbr.rel (%p896) target = $region68
        $region67: #{tpu_custom_call.1} parent=63 // pred_region
          %p899 = scmp.lt.s32.totalorder %s30, 1
          %s900 = scalar_select %p899, %s30, 1
          %s901 = smul.addr %s900, 2
          %s902 = smul.addr %s901, 8
          %s903 = scalar_lea.vmem %s4, %s902
        $region68: #{tpu_custom_call.1} parent=63 // pred_fallthru
          _
      $region64: #{tpu_custom_call.1} parent=5 // pred_fallthru
        _
    $region6: #{tpu_custom_call.1} parent=1 // loop_footer
      %s23 = sadd.s32 1, %s19
    $region7: #{tpu_custom_call.1} parent=1 // loop_footer_branch
      %18 = sbr.rel target = $region3
    $region8: #{tpu_custom_call.1} parent=1 // loop_exit
      _
    %904 = vsyncpa [#allocation4], 1
    %s905 = scalar_lea.sflag [#allocation4], 1
    %906 = vsyncpa %s905, 1
    %907 = vsyncpa [#allocation6], 1
    %s908 = scalar_lea.sflag [#allocation6], 1
    %909 = vsyncpa %s908, 1
    %910 = vsyncpa [#allocation9], 1
    %s911 = scalar_lea.sflag [#allocation9], 1
    %912 = vsyncpa %s911, 1

</llo_original>
